<compile_context>
chip_gen: v7x
topology: tpu7x:2x2x1
jax: 0.10.0
libtpu: 0.0.40
codegen_flags: <defaults>
</compile_context>

<pallas_src>
import functools

import jax
import jax.numpy as jnp
from jax.experimental import pallas as pl
from jax.experimental.pallas import tpu as pltpu

EPS = 1e-6
LANES = 128
SUB_ACC = 8                        # f32 sublane tile height (accumulator rows)
TARGET_BLOCK_BYTES = 4 << 20       # per-input block bytes (8 MiB moved / step)
VMEM_LIMIT_BYTES = 48 << 20        # 2 inputs x 2 pipeline bufs x 4 MiB + slack


def _num_tensorcores():
    # v7x has 2 TensorCores per chip; v5e/v6e have 1.  Fallback 1 is always
    # safe (correctness unaffected, just no 2-core split).
    try:
        kind = jax.devices()[0].device_kind.lower()
    except Exception:
        return 1
    return 2 if ("v7" in kind or "7x" in kind) else 1


def _charbonnier_kernel(x_ref, y_ref, o_ref, acc_ref, *,
                        n_valid, block_rows, blocks_per_shard, num_blocks,
                        last_block_partial):
    p = pl.program_id(0)       # shard axis ("parallel": maps to both TCs on v7x)
    i = pl.program_id(1)       # streaming axis ("arbitrary")

    @pl.when(i == 0)
    def _():
        acc_ref[...] = jnp.zeros_like(acc_ref)

    def accumulate(masked):
        d = x_ref[...].astype(jnp.float32) - y_ref[...].astype(jnp.float32)
        err = jnp.sqrt(d * d + jnp.float32(EPS))
        if masked:
            # Static thresholds relative to the final block: masks both the
            # jnp.pad lane tail and any Pallas grid-tail padding rows.  Uses
            # row/lane compares (no flat index -> no int32 overflow hazard).
            valid_in_block = n_valid - (num_blocks - 1) * block_rows * LANES
            full_rows = valid_in_block // LANES
            rem = valid_in_block % LANES
            row = jax.lax.broadcasted_iota(jnp.int32, err.shape, 0)
            lane = jax.lax.broadcasted_iota(jnp.int32, err.shape, 1)
            keep = (row < full_rows) | ((row == full_rows) & (lane < rem))
            err = jnp.where(keep, err, jnp.float32(0.0))
        # Pure VALU accumulation into the (8, 128) vector accumulator: no
        # per-step cross-sublane (XLU) reduce; collapse once in the epilogue.
        acc_ref[...] += err.reshape(block_rows // SUB_ACC, SUB_ACC, LANES).sum(axis=0)

    if last_block_partial:
        # Fast path: only the single final block of the whole stream pays the
        # iota/compare/select mask cost; every interior block is unmasked.
        is_tail = (p * blocks_per_shard + i) == (num_blocks - 1)

        @pl.when(is_tail)
        def _():
            accumulate(True)

        @pl.when(jnp.logical_not(is_tail))
        def _():
            accumulate(False)
    else:
        # Fully aligned input: no mask code anywhere.
        accumulate(False)

    @pl.when(i == pl.num_programs(1) - 1)
    def _():
        # Single cross-lane (XLU) reduce per shard; per-shard partial sum.
        o_ref[0, 0] = jnp.sum(acc_ref[...])


def l1_charbonnier_loss(x, y, *, target_block_bytes=TARGET_BLOCK_BYTES):
    assert x.shape == y.shape, "X and Y must have the same shape"
    n = int(x.size)

    # Stream inputs in their native dtype; the f32 cast happens in-kernel.
    xf = jnp.asarray(x).reshape(-1)
    yf = jnp.asarray(y).reshape(-1)

    # Sublane multiple for the narrowest input dtype (8 f32 / 16 bf16 / 32 i8).
    min_item = min(jnp.dtype(xf.dtype).itemsize, jnp.dtype(yf.dtype).itemsize)
    sub = max(8, 32 // min_item)
    align = sub * LANES

    pad = (-n) % align
    if pad:
        # Rare ragged-size path (one extra copy of each input).  Padded
        # elements are zeroed by the kernel's single masked tail block.
        # TODO(synk): a manual-DMA (pl.ANY) path could avoid this copy.
        xf = jnp.pad(xf, (0, pad))
        yf = jnp.pad(yf, (0, pad))
    rows = (n + pad) // LANES

    x2 = xf.reshape(rows, LANES)
    y2 = yf.reshape(rows, LANES)

    # Byte-budgeted block rows -> constant DMA per grid step across dtypes.
    max_item = max(x2.dtype.itemsize, y2.dtype.itemsize)
    budget_rows = max(sub, (target_block_bytes // (LANES * max_item)) // sub * sub)
    br = min(budget_rows, rows)                 # multiple of `sub`
    nb = pl.cdiv(rows, br)                      # total row-blocks

    # Shard across TensorCores only where a second core exists (v7x) and the
    # split is exact, so no duplicated / clamped block is ever DMA'd.
    num_tc = _num_tensorcores()
    num_shards = num_tc if (num_tc > 1 and nb % num_tc == 0) else 1
    bps = nb // num_shards                      # blocks per shard (exact)

    last_block_partial = (nb * br * LANES) != n

    kernel = functools.partial(
        _charbonnier_kernel, n_valid=n, block_rows=br,
        blocks_per_shard=bps, num_blocks=nb,
        last_block_partial=last_block_partial)

    def in_map(p, i):
        return (p * bps + i, 0)                 # never OOB, never duplicated

    bytes_in = rows * LANES * (x2.dtype.itemsize + y2.dtype.itemsize)
    partials = pl.pallas_call(
        kernel,
        out_shape=jax.ShapeDtypeStruct((num_shards, 1), jnp.float32),
        grid_spec=pltpu.PrefetchScalarGridSpec(
            num_scalar_prefetch=0,
            grid=(num_shards, bps),
            in_specs=[
                pl.BlockSpec((br, LANES), in_map),
                pl.BlockSpec((br, LANES), in_map),
            ],
            out_specs=pl.BlockSpec((1, 1), lambda p, i: (p, 0),
                                   memory_space=pltpu.SMEM),
            scratch_shapes=[pltpu.VMEM((SUB_ACC, LANES), jnp.float32)],
        ),
        compiler_params=pltpu.CompilerParams(
            dimension_semantics=("parallel", "arbitrary"),
            vmem_limit_bytes=VMEM_LIMIT_BYTES),
        cost_estimate=pl.CostEstimate(
            flops=4 * n, transcendentals=n,
            bytes_accessed=bytes_in + 4 * num_shards),
    )(x2, y2)

    return jnp.sum(partials) / jnp.float32(n)


if __name__ == "__main__":
    key = jax.random.PRNGKey(0)
    kx, ky = jax.random.split(key)

    def ref_loss(X, Y):
        d = X.astype(jnp.float32) - Y.astype(jnp.float32)
        return jnp.mean(jnp.sqrt(d * d + EPS))

    # Primary NCHW shape implied by the module's intended (image-loss) use.
    shape = (2, 4, 16, 16)
    X = jax.random.normal(kx, shape, dtype=jnp.float32)
    Y = jax.random.normal(ky, shape, dtype=jnp.float32)
    loss = jax.block_until_ready(l1_charbonnier_loss(X, Y))
    assert jnp.allclose(loss, ref_loss(X, Y), rtol=1e-5, atol=1e-6), (
        loss, ref_loss(X, Y))

    # Ragged element count -> exercises pad + the single masked tail block.
    shape2 = (3, 5, 7, 11)
    X2 = jax.random.normal(kx, shape2, dtype=jnp.float32)
    Y2 = jax.random.normal(ky, shape2, dtype=jnp.float32)
    loss2 = jax.block_until_ready(l1_charbonnier_loss(X2, Y2))
    assert jnp.allclose(loss2, ref_loss(X2, Y2), rtol=1e-5, atol=1e-6)

    # Tiny byte budget -> exercises multi-block streaming (+ exact 2-TC split
    # on v7x, unmasked fast path on every block).
    loss3 = jax.block_until_ready(
        l1_charbonnier_loss(X, Y, target_block_bytes=8 * LANES * 4))
    assert jnp.allclose(loss3, ref_loss(X, Y), rtol=1e-5, atol=1e-6)

    # bf16 inputs -> exercises native-dtype DMA with the byte-based budget
    # and the 16-row sublane alignment.
    Xb = X.astype(jnp.bfloat16)
    Yb = Y.astype(jnp.bfloat16)
    loss4 = jax.block_until_ready(l1_charbonnier_loss(Xb, Yb))
    assert jnp.allclose(loss4, ref_loss(Xb, Yb), rtol=1e-5, atol=1e-6)

    print("KERNEL_OK")
</pallas_src>

<mosaic_0001>
module attributes {stable_mosaic.version = 11 : i64} {
  func.func @_charbonnier_kernel(%arg0: i32, %arg1: i32, %arg2: memref<16x128xf32, #tpu.memory_space<vmem>>, %arg3: memref<16x128xf32, #tpu.memory_space<vmem>>, %arg4: memref<1x1xf32, #tpu.memory_space<smem>>, %arg5: memref<8x128xf32, #tpu.memory_space<vmem>>) attributes {dimension_semantics = [#tpu.dimension_semantics<parallel>, #tpu.dimension_semantics<arbitrary>], iteration_bounds = array<i64: 1, 1>, scalar_prefetch = 0 : i64, scratch_operands = 1 : i64, tpu.core_type = #tpu.core_type<tc>, window_params = [{transform_indices = @transform_0, window_bounds = array<i64: 16, 128>}, {transform_indices = @transform_1, window_bounds = array<i64: 16, 128>}, {transform_indices = @transform_2, window_bounds = array<i64: 1, 1>}]} {
    %c0_i32 = arith.constant 0 : i32
    %0 = arith.cmpi eq, %arg1, %c0_i32 : i32
    %1 = arith.extui %0 : i1 to i32
    %c0_i32_0 = arith.constant 0 : i32
    %2 = arith.cmpi ne, %1, %c0_i32_0 : i32
    scf.if %2 {
      %cst_11 = arith.constant 0.000000e+00 : f32
      %18 = vector.broadcast %cst_11 : f32 to vector<8x128xf32>
      %c0_12 = arith.constant 0 : index
      %c0_13 = arith.constant 0 : index
      %19 = vector.load %arg5[%c0_12, %c0_13] : memref<8x128xf32, #tpu.memory_space<vmem>>, vector<8x128xf32>
      tpu.vector_store %arg5[%c0_12, %c0_13], %18 {strides = array<i32>} : memref<8x128xf32, #tpu.memory_space<vmem>>, vector<8x128xf32>,
    } else {
    }
    %c0 = arith.constant 0 : index
    %c0_1 = arith.constant 0 : index
    %3 = vector.load %arg2[%c0, %c0_1] : memref<16x128xf32, #tpu.memory_space<vmem>>, vector<16x128xf32>
    %c0_2 = arith.constant 0 : index
    %c0_3 = arith.constant 0 : index
    %4 = vector.load %arg3[%c0_2, %c0_3] : memref<16x128xf32, #tpu.memory_space<vmem>>, vector<16x128xf32>
    %5 = arith.subf %3, %4 : vector<16x128xf32>
    %6 = arith.mulf %5, %5 : vector<16x128xf32>
    %cst = arith.constant 9.99999997E-7 : f32
    %7 = vector.broadcast %cst : f32 to vector<16x128xf32>
    %8 = arith.addf %6, %7 : vector<16x128xf32>
    %9 = math.sqrt %8 : vector<16x128xf32>
    %c0_4 = arith.constant 0 : index
    %c0_5 = arith.constant 0 : index
    %10 = vector.load %arg5[%c0_4, %c0_5] : memref<8x128xf32, #tpu.memory_space<vmem>>, vector<8x128xf32>
    %11 = vector.shape_cast %9 : vector<16x128xf32> to vector<2x8x128xf32>
    %cst_6 = arith.constant dense<0.000000e+00> : vector<8x128xf32>
    %12 = vector.multi_reduction <add>, %11, %cst_6 [0] : vector<2x8x128xf32> to vector<8x128xf32>
    %13 = arith.addf %10, %12 : vector<8x128xf32>
    %c0_7 = arith.constant 0 : index
    %c0_8 = arith.constant 0 : index
    %14 = vector.load %arg5[%c0_7, %c0_8] : memref<8x128xf32, #tpu.memory_space<vmem>>, vector<8x128xf32>
    tpu.vector_store %arg5[%c0_7, %c0_8], %13 {strides = array<i32>} : memref<8x128xf32, #tpu.memory_space<vmem>>, vector<8x128xf32>,
    %c0_i32_9 = arith.constant 0 : i32
    %15 = arith.cmpi eq, %arg1, %c0_i32_9 : i32
    %16 = arith.extui %15 : i1 to i32
    %c0_i32_10 = arith.constant 0 : i32
    %17 = arith.cmpi ne, %16, %c0_i32_10 : i32
    scf.if %17 {
      %c0_11 = arith.constant 0 : index
      %c0_12 = arith.constant 0 : index
      %18 = vector.load %arg5[%c0_11, %c0_12] : memref<8x128xf32, #tpu.memory_space<vmem>>, vector<8x128xf32>
      %19 = vector.shape_cast %18 : vector<8x128xf32> to vector<1x8x128xf32>
      %cst_13 = arith.constant dense<0.000000e+00> : vector<1xf32>
      %20 = vector.multi_reduction <add>, %19, %cst_13 [1, 2] : vector<1x8x128xf32> to vector<1xf32>
      %21 = vector.shape_cast %20 : vector<1xf32> to vector<1x1x1xf32>
      %22 = vector.extract %21[0, 0, 0] : f32 from vector<1x1x1xf32>
      %c0_14 = arith.constant 0 : index
      %c0_15 = arith.constant 0 : index
      %23 = memref.load %arg4[%c0_14, %c0_15] : memref<1x1xf32, #tpu.memory_space<smem>>
      memref.store %22, %arg4[%c0_14, %c0_15] : memref<1x1xf32, #tpu.memory_space<smem>>
    } else {
    }
    return
  }
  func.func @transform_0(%arg0: i32, %arg1: i32) -> (i32, i32) {
    %c1_i32 = arith.constant 1 : i32
    %0 = arith.muli %arg0, %c1_i32 : i32
    %1 = arith.addi %0, %arg1 : i32
    %c0_i32 = arith.constant 0 : i32
    %c0_i32_0 = arith.constant 0 : i32
    return %1, %c0_i32 : i32, i32
  }
  func.func @transform_1(%arg0: i32, %arg1: i32) -> (i32, i32) {
    %c1_i32 = arith.constant 1 : i32
    %0 = arith.muli %arg0, %c1_i32 : i32
    %1 = arith.addi %0, %arg1 : i32
    %c0_i32 = arith.constant 0 : i32
    %c0_i32_0 = arith.constant 0 : i32
    return %1, %c0_i32 : i32, i32
  }
  func.func @transform_2(%arg0: i32, %arg1: i32) -> (i32, i32) {
    %c0_i32 = arith.constant 0 : i32
    %c0_i32_0 = arith.constant 0 : i32
    return %arg0, %c0_i32 : i32, i32
  }
}

</mosaic_0001>

<llo_original>
// kernel: tpu_custom_call.1
$region0: #{tpu_custom_call.1}
  #allocation0 [shape = 'u32[]', space=smem, size = 0x4, offset = 0x4, fixed_abs, tag = 'smem constant byte address 0x4 - core index']
  #allocation1 [shape = 'u32[144,128]{1,0:T(1,128)}', space=vmem, size = 0x12000, scoped, tag = 'internal scratch']
  #allocation2 [shape = 'f32[8,128]{1,0:T(8,128)}', space=vmem, size = 0x1000, scoped, tag = 'scratch operand']
  %s0 = inlined_call_operand.hbm [shape: f32[16,128], index: 0, kind: input, shape index: {}]
  %s1 = inlined_call_operand.hbm [shape: f32[16,128], index: 1, kind: input, shape index: {}]
  %s2 = inlined_call_operand.hbm [shape: f32[1,1], index: 2, kind: output, shape index: {}]
  %s3 = sld [smem:[#allocation0]]
  $region34: #{tpu_custom_call.1} parent=0
    _
  %s5 = ssub.s32 1, %s3
  %s6 = scalar_select 0, %s5, %s3
  $region1: #{tpu_custom_call.1} parent=0
    #allocation3 [shape = 'u8[8192]{0}', space=vmem, size = 0x2000, scoped, tag = 'input window, operand 0, single buffered']
    #allocation4 [shape = 's32[1]{0}', space=sflag, size = 0x4, scoped, tag = 'scoped memory for tpu_custom_call.1']
    #allocation5 [shape = 's32[1]{0}', space=sflag, size = 0x4, scoped, tag = 'scoped memory for tpu_custom_call.1']
    #allocation6 [shape = 'u8[8192]{0}', space=vmem, size = 0x2000, scoped, tag = 'input window, operand 1, single buffered']
    #allocation7 [shape = 's32[1]{0}', space=sflag, size = 0x4, scoped, tag = 'scoped memory for tpu_custom_call.1']
    #allocation8 [shape = 'u8[512]{0}', space=smem, size = 0x200, scoped, tag = 'output window, operand 0, single buffered']
    %7 = vsyncpa [#allocation4], 0
    %8 = vsyncpa [#allocation7], 0
    %9 = vsyncpa [#allocation5], 0
    // Predicated region
    $region2: #{tpu_custom_call.1} parent=1 // pred_check
      _
    $region3: #{tpu_custom_call.1} parent=1 // pred_check_branch
      %11 = sbr.rel (0) target = $region5
    $region4: #{tpu_custom_call.1} parent=1 // pred_region
      %s12 = sadd.s32 0, 0
      %s13 = smul.u32 2, %s12
      %s15 = ssub.s32 256, 256
      %16 = vsyncadd [#allocation4], %s15
      %s17 = smul.addr %s13, 128
      %s18 = scalar_lea.hbm %s0, %s17
      %s19 = sshll.u32 [#allocation3], 4
      %s20 = int_to_ptr.vmem [resolvable:$true] %s19
      %25 = dma.hbm_to_vmem [thread:$0]  %s18, 256, %s20, [#allocation4], 128, 128, 8
    $region5: #{tpu_custom_call.1} parent=1 // pred_fallthru
      _
    // Predicated region
    $region6: #{tpu_custom_call.1} parent=1 // pred_check
      _
    $region7: #{tpu_custom_call.1} parent=1 // pred_check_branch
      %27 = sbr.rel (0) target = $region9
    $region8: #{tpu_custom_call.1} parent=1 // pred_region
      %s28 = sadd.s32 0, 0
      %s29 = smul.u32 2, %s28
      %s31 = ssub.s32 256, 256
      %32 = vsyncadd [#allocation7], %s31
      %s33 = smul.addr %s29, 128
      %s34 = scalar_lea.hbm %s1, %s33
      %s35 = sshll.u32 [#allocation6], 4
      %s36 = int_to_ptr.vmem [resolvable:$true] %s35
      %41 = dma.hbm_to_vmem [thread:$0]  %s34, 256, %s36, [#allocation7], 128, 128, 8
    $region9: #{tpu_custom_call.1} parent=1 // pred_fallthru
      _
    // Predicated region
    $region10: #{tpu_custom_call.1} parent=1 // pred_check
      _
    $region11: #{tpu_custom_call.1} parent=1 // pred_check_branch
      %43 = sbr.rel (0) target = $region13
    $region12: #{tpu_custom_call.1} parent=1 // pred_region
      %44 = dma.done [#allocation4], 256
    $region13: #{tpu_custom_call.1} parent=1 // pred_fallthru
      _
    // Predicated region
    $region14: #{tpu_custom_call.1} parent=1 // pred_check
      _
    $region15: #{tpu_custom_call.1} parent=1 // pred_check_branch
      %46 = sbr.rel (0) target = $region17
    $region16: #{tpu_custom_call.1} parent=1 // pred_region
      %47 = dma.done [#allocation7], 256
    $region17: #{tpu_custom_call.1} parent=1 // pred_fallthru
      _
    %s48 = sadd.s32 0, 0
    %s49 = smul.u32 2, %s48
    %s50 = sadd.s32 0, 0
    %s51 = smul.u32 2, %s50
    %p52 = scmp.eq.s32.totalorder 0, 0
    // Predicated region
    $region18: #{tpu_custom_call.1} parent=1 // pred_check
      %p53 = pneg %p52
    $region19: #{tpu_custom_call.1} parent=1 // pred_check_branch
      %55 = sbr.rel (%p53) target = $region21
    $region20: #{tpu_custom_call.1} parent=1 // pred_region
      %56 = vst [vmem:[#allocation2] sm:$0xff] 0.0
    $region21: #{tpu_custom_call.1} parent=1 // pred_fallthru
      _
    %v57 = vld [vmem:[#allocation3] sm:$0xff]
    %v58 = vld [vmem:[#allocation3 + $0x8] sm:$0xff]
    %v59 = vld [vmem:[#allocation6] sm:$0xff]
    %v60 = vld [vmem:[#allocation6 + $0x8] sm:$0xff]
    %v61 = vsub.f32 %v57, %v59
    %v62 = vsub.f32 %v58, %v60
    %v63 = vmul.f32 %v61, %v61
    %v64 = vmul.f32 %v62, %v62
    %v65 = vadd.f32 %v63, 1e-06
    %v66 = vadd.f32 %v64, 1e-06
    %v67 = vrsqrt.pop %v65
    %v68 = vmul.f32 %v65, %v67
    %vm69 = vcmp.eq.f32.partialorder %v65, inf
    %v70 = vsel %vm69, %v65, %v68
    %vm71 = vcmp.eq.f32.partialorder %v65, 0.0
    %v72 = vand.u32 %v65, 2147483648
    %v73 = vsel %vm71, %v72, %v70
    %v74 = vrsqrt.pop %v66
    %v75 = vmul.f32 %v66, %v74
    %vm76 = vcmp.eq.f32.partialorder %v66, inf
    %v77 = vsel %vm76, %v66, %v75
    %vm78 = vcmp.eq.f32.partialorder %v66, 0.0
    %v79 = vand.u32 %v66, 2147483648
    %v80 = vsel %vm78, %v79, %v77
    %v81 = vld [vmem:[#allocation2] sm:$0xff]
    %v82 = vadd.f32 %v73, %v80
    %v83 = vadd.f32 %v81, %v82
    %84 = vst [vmem:[#allocation2] sm:$0xff] %v83
    // Predicated region
    $region22: #{tpu_custom_call.1} parent=1 // pred_check
      %p85 = pneg %p52
    $region23: #{tpu_custom_call.1} parent=1 // pred_check_branch
      %87 = sbr.rel (%p85) target = $region25
    $region24: #{tpu_custom_call.1} parent=1 // pred_region
      %v88 = vld [vmem:[#allocation2] sm:$0xff]
      %89 = vadd.xlane.f32.xlu0 %v88
      %v90 = vpop.xlane.xlu0 %89
      %v91 = vrot.slane %v90, 4
      %v92 = vadd.f32 %v90, %v91
      %v93 = vrot.slane %v92, 2
      %v94 = vadd.f32 %v92, %v93
      %v95 = vrot.slane %v94, 1
      %v96 = vadd.f32 %v94, %v95
      %s97 = vtos %v96
      %s98 = scalar_lea.smem [#allocation8], 0
      %99 = sst [smem:[%s98]] %s97
    $region25: #{tpu_custom_call.1} parent=1 // pred_fallthru
      _
    // Predicated region
    $region26: #{tpu_custom_call.1} parent=1 // pred_check
      _
    $region27: #{tpu_custom_call.1} parent=1 // pred_check_branch
      %101 = sbr.rel (0) target = $region29
    $region28: #{tpu_custom_call.1} parent=1 // pred_region
      %s103 = ssub.s32 16, 16
      %104 = vsyncadd [#allocation5], %s103
      %107 = dma.smem_to_hbm [#allocation8], 16, %s2, [#allocation5]
    $region29: #{tpu_custom_call.1} parent=1 // pred_fallthru
      _
    // Predicated region
    $region30: #{tpu_custom_call.1} parent=1 // pred_check
      _
    $region31: #{tpu_custom_call.1} parent=1 // pred_check_branch
      %109 = sbr.rel (0) target = $region33
    $region32: #{tpu_custom_call.1} parent=1 // pred_region
      %110 = dma.done [#allocation5], 16
    $region33: #{tpu_custom_call.1} parent=1 // pred_fallthru
      _
    %111 = sfence
    %112 = vsyncpa [#allocation4], 1
    %113 = vsyncpa [#allocation7], 1
    %114 = vsyncpa [#allocation5], 1

</llo_original>
